<compile_context>
chip_gen: v5e
topology: v5e:2x2
jax: 0.10.0
libtpu: 0.0.40
codegen_flags: <defaults>
</compile_context>

<pallas_src>
import jax
import jax.numpy as jnp
from jax import lax
from jax.experimental import pallas as pl
from jax.experimental.pallas import tpu as pltpu
import numpy as np

_PREC = jax.lax.Precision.HIGHEST  # keep f32-accurate MXU accumulation


def _actor_kernel(x_ref, k1_ref, w2_ref, aux_ref, out_ref):
    H, CW = x_ref.shape
    C = w2_ref.shape[1]

    x = x_ref[...]                      # (H, C*W)   lane-packed input sample
    k1 = k1_ref[...]                    # (C*W, C*W) banded conv1 matrix
    w2 = w2_ref[...]                    # (C*W, C)   conv2 weights

    b1 = aux_ref[0:1, 0:CW]             # (1, C*W)  conv1 bias (repeated per W)
    b2 = aux_ref[1:2, 0:C]              # (1, C)    conv2 bias
    w3h = aux_ref[2:3, 0:C]             # (1, C)    conv3 weights for y2 channels
    w3a = aux_ref[2:3, C:C + 1]         # (1, 1)    conv3 weight for actions_prev
    b3 = aux_ref[2:3, C + 1:C + 2]      # (1, 1)    conv3 bias
    aprev = aux_ref[3:4, 0:H]           # (1, H)    actions_prev (lane-dense row)

    # conv1: Conv2d(C -> C, (1,3), padding='same') + tanh  ==  one MXU matmul.
    y1 = jnp.tanh(jnp.dot(x, k1, precision=_PREC,
                          preferred_element_type=jnp.float32) + b1)          # (H, C*W)
    # conv2: Conv2d(C -> C, (1,W), valid) + tanh  ==  one MXU matmul.
    y2 = jnp.tanh(jnp.dot(y1, w2, precision=_PREC,
                          preferred_element_type=jnp.float32) + b2)          # (H, C)
    # conv3: Conv2d(C+1 -> 1, (1,1)) over [y2, actions_prev] -> lane-dense logits.
    logits = (jnp.dot(w3h, y2.T, precision=_PREC,
                      preferred_element_type=jnp.float32)
              + w3a * aprev + b3)                                            # (1, H)

    # Prepend cash-bias logit (== 1.0) and softmax over the action axis (lanes).
    cash = jnp.float32(1.0)
    m = jnp.maximum(jnp.max(logits, axis=-1, keepdims=True), cash)           # (1, 1)
    e_act = jnp.exp(logits - m)                                              # (1, H)
    e_cash = jnp.exp(cash - m)                                               # (1, 1)
    denom = e_cash + jnp.sum(e_act, axis=-1, keepdims=True)                  # (1, 1)
    out_ref[...] = jnp.concatenate([e_cash, e_act], axis=-1) / denom         # (1, H+1)


def _pack_params(params, actions_prev, C, H, W):
    """Host-side layout plumbing: build the matmul-form weights + packed aux row."""
    w1, b1, w2, b2, w3, b3 = params
    CW = C * W

    # conv1 as a banded lane-space matrix:
    #   K[ci*W + (w + k - 1), co*W + w] = w1[co, ci, 0, k]
    # (entries with w + k - 1 outside [0, W) are simply absent == zero padding).
    rows, cols, coi, cii, ki = [], [], [], [], []
    for co in range(C):
        for ci in range(C):
            for k in range(3):
                for w in range(W):
                    wp = w + k - 1
                    if 0 <= wp < W:
                        rows.append(ci * W + wp)
                        cols.append(co * W + w)
                        coi.append(co)
                        cii.append(ci)
                        ki.append(k)
    vals = w1[np.asarray(coi), np.asarray(cii), 0, np.asarray(ki)].astype(jnp.float32)
    k1 = jnp.zeros((CW, CW), jnp.float32).at[np.asarray(rows), np.asarray(cols)].set(vals)

    # conv2 weights: W2m[ci*W + w, co] = w2[co, ci, 0, w]
    w2m = w2.reshape(C, CW).T.astype(jnp.float32)

    # Pack every small parameter into ONE operand (cuts per-operand DMA/setup cost).
    AW = max(CW, H, C + 2)
    w3f = w3.reshape(-1).astype(jnp.float32)                 # (C + 1,)
    aux = jnp.zeros((4, AW), jnp.float32)
    aux = aux.at[0, :CW].set(jnp.repeat(b1.astype(jnp.float32), W))   # b1 per (co, w)
    aux = aux.at[1, :C].set(b2.astype(jnp.float32))
    aux = aux.at[2, :C].set(w3f[:C])
    aux = aux.at[2, C].set(w3f[C])
    aux = aux.at[2, C + 1].set(b3.astype(jnp.float32)[0])
    aux = aux.at[3, :H].set(actions_prev.reshape(-1).astype(jnp.float32))
    return k1, w2m, aux


def actor_forward(x, params, actions_prev):
    """x: (B, C, H, W) NCHW.  Returns (probs (B,1,H+1,1), new actions_prev (B,1,H,1))."""
    B, C, H, W = x.shape
    CW = C * W

    # Lane-dense per-sample packing: x_p[b, h, ci*W + w] = x[b, ci, h, w].
    x_p = jnp.transpose(x, (0, 2, 1, 3)).reshape(B, H, CW).astype(jnp.float32)
    k1, w2m, aux = _pack_params(params, actions_prev, C, H, W)

    probs_row = pl.pallas_call(
        _actor_kernel,
        out_shape=jax.ShapeDtypeStruct((B, 1, H + 1), jnp.float32),
        grid=(B,),
        in_specs=[
            pl.BlockSpec((None, H, CW), lambda b: (b, 0, 0)),      # per-sample input
            pl.BlockSpec((CW, CW), lambda b: (0, 0)),              # conv1 matrix (shared)
            pl.BlockSpec((CW, C), lambda b: (0, 0)),               # conv2 matrix (shared)
            pl.BlockSpec((4, aux.shape[1]), lambda b: (0, 0)),     # packed small params
        ],
        out_specs=pl.BlockSpec((None, 1, H + 1), lambda b: (b, 0, 0)),
        compiler_params=pltpu.CompilerParams(
            dimension_semantics=("parallel",)),                    # 2 TCs on v7x
    )(x_p, k1, w2m, aux)

    probs = probs_row.reshape(B, 1, H + 1, 1)
    # TODO(synk): optimizer/MSELoss/checkpoint IO and the stateful in-place update of
    # self.actions_prev are training/bookkeeping concerns; the new buffer is returned
    # functionally here (matches the module exactly for B == 1).
    new_actions_prev = probs[..., 1:, :]
    return probs, new_actions_prev


def actor_reference(x, params, actions_prev):
    """Pure-JAX reference mirroring the PyTorch forward (for verification)."""
    w1, b1, w2, b2, w3, b3 = params
    B = x.shape[0]
    dn = ('NCHW', 'OIHW', 'NCHW')
    y = lax.conv_general_dilated(x, w1, (1, 1), [(0, 0), (1, 1)],
                                 dimension_numbers=dn, precision=_PREC)
    y = jnp.tanh(y + b1.reshape(1, -1, 1, 1))
    y = lax.conv_general_dilated(y, w2, (1, 1), 'VALID',
                                 dimension_numbers=dn, precision=_PREC)
    y = jnp.tanh(y + b2.reshape(1, -1, 1, 1))
    ap = jnp.broadcast_to(actions_prev, (B,) + actions_prev.shape[1:])
    y = jnp.concatenate([y, ap], axis=1)
    y = lax.conv_general_dilated(y, w3, (1, 1), 'VALID',
                                 dimension_numbers=dn, precision=_PREC)
    y = y + b3.reshape(1, -1, 1, 1)
    cash = jnp.ones((B, 1, 1, 1), jnp.float32)
    y = jnp.concatenate([cash, y], axis=2)
    return jax.nn.softmax(y, axis=2)


if __name__ == "__main__":
    # input_dims = (n_feats, n_actions, n_window); the module's forward is batch-1
    # (it concatenates a batch-1 actions_prev), so batch>1 here means "evaluate the
    # actor on several observations with the same actions_prev state" (RL rollout).
    n_feats, n_actions, n_window = 4, 8, 16
    B = 4

    key = jax.random.PRNGKey(0)
    ks = jax.random.split(key, 8)
    w1 = 0.2 * jax.random.normal(ks[0], (n_feats, n_feats, 1, 3), jnp.float32)
    b1 = 0.1 * jax.random.normal(ks[1], (n_feats,), jnp.float32)
    w2 = 0.2 * jax.random.normal(ks[2], (n_feats, n_feats, 1, n_window), jnp.float32)
    b2 = 0.1 * jax.random.normal(ks[3], (n_feats,), jnp.float32)
    w3 = 0.2 * jax.random.normal(ks[4], (1, n_feats + 1, 1, 1), jnp.float32)
    b3 = 0.1 * jax.random.normal(ks[5], (1,), jnp.float32)
    actions_prev = jax.nn.softmax(
        jax.random.normal(ks[6], (1, 1, n_actions, 1), jnp.float32), axis=2)
    x = jax.random.normal(ks[7], (B, n_feats, n_actions, n_window), jnp.float32)

    params = (w1, b1, w2, b2, w3, b3)

    probs, new_prev = actor_forward(x, params, actions_prev)
    probs = jax.block_until_ready(probs)

    ref = actor_reference(x, params, actions_prev)
    np.testing.assert_allclose(np.asarray(probs), np.asarray(ref), rtol=5e-3, atol=1e-3)

    print("KERNEL_OK")
</pallas_src>

<mosaic_0001>
module attributes {stable_mosaic.version = 11 : i64} {
  func.func @_actor_kernel(%arg0: i32, %arg1: memref<1x8x64xf32, #tpu.memory_space<vmem>>, %arg2: memref<64x64xf32, #tpu.memory_space<vmem>>, %arg3: memref<64x4xf32, #tpu.memory_space<vmem>>, %arg4: memref<4x64xf32, #tpu.memory_space<vmem>>, %arg5: memref<1x1x9xf32, #tpu.memory_space<vmem>>) attributes {dimension_semantics = [#tpu.dimension_semantics<parallel>], iteration_bounds = array<i64: 4>, scalar_prefetch = 0 : i64, scratch_operands = 0 : i64, tpu.core_type = #tpu.core_type<tc>, window_params = [{transform_indices = @transform_0, window_bounds = array<i64: 1, 8, 64>}, {pipeline_mode = #tpu.pipeline_mode<synchronous>, transform_indices = @transform_1, window_bounds = array<i64: 64, 64>}, {pipeline_mode = #tpu.pipeline_mode<synchronous>, transform_indices = @transform_2, window_bounds = array<i64: 64, 4>}, {pipeline_mode = #tpu.pipeline_mode<synchronous>, transform_indices = @transform_3, window_bounds = array<i64: 4, 64>}, {transform_indices = @transform_4, window_bounds = array<i64: 1, 1, 9>}]} {
    %c0 = arith.constant 0 : index
    %c0_0 = arith.constant 0 : index
    %c0_1 = arith.constant 0 : index
    %0 = vector.load %arg1[%c0, %c0_0, %c0_1] : memref<1x8x64xf32, #tpu.memory_space<vmem>>, vector<1x8x64xf32>
    %1 = vector.shape_cast %0 : vector<1x8x64xf32> to vector<8x64xf32>
    %c0_2 = arith.constant 0 : index
    %c0_3 = arith.constant 0 : index
    %2 = vector.load %arg2[%c0_2, %c0_3] : memref<64x64xf32, #tpu.memory_space<vmem>>, vector<64x64xf32>
    %c0_4 = arith.constant 0 : index
    %c0_5 = arith.constant 0 : index
    %3 = vector.load %arg3[%c0_4, %c0_5] : memref<64x4xf32, #tpu.memory_space<vmem>>, vector<64x4xf32>
    %c0_6 = arith.constant 0 : index
    %c0_7 = arith.constant 0 : index
    %4 = vector.load %arg4[%c0_6, %c0_7] : memref<4x64xf32, #tpu.memory_space<vmem>>, vector<1x64xf32>
    %c1 = arith.constant 1 : index
    %c0_8 = arith.constant 0 : index
    %5 = vector.load %arg4[%c1, %c0_8] : memref<4x64xf32, #tpu.memory_space<vmem>>, vector<1x4xf32>
    %c2 = arith.constant 2 : index
    %c0_9 = arith.constant 0 : index
    %6 = vector.load %arg4[%c2, %c0_9] : memref<4x64xf32, #tpu.memory_space<vmem>>, vector<1x4xf32>
    %c2_10 = arith.constant 2 : index
    %c4 = arith.constant 4 : index
    %7 = vector.load %arg4[%c2_10, %c4] : memref<4x64xf32, #tpu.memory_space<vmem>>, vector<1x1xf32>
    %c2_11 = arith.constant 2 : index
    %c5 = arith.constant 5 : index
    %8 = vector.load %arg4[%c2_11, %c5] : memref<4x64xf32, #tpu.memory_space<vmem>>, vector<1x1xf32>
    %c3 = arith.constant 3 : index
    %c0_12 = arith.constant 0 : index
    %9 = vector.load %arg4[%c3, %c0_12] : memref<4x64xf32, #tpu.memory_space<vmem>>, vector<1x8xf32>
    %cst = arith.constant dense<0.000000e+00> : vector<8x64xf32>
    %10 = tpu.matmul %1, %2, %cst {dimension_numbers = #tpu.dot_dimension_numbers<[1], [0], [0], [1], [0, 0, 1, 1], [], []>, precision = #tpu.contract_precision<fp32>} : vector<8x64xf32>, vector<64x64xf32>, vector<8x64xf32> -> vector<8x64xf32>
    %11 = vector.broadcast %4 : vector<1x64xf32> to vector<8x64xf32>
    %12 = arith.addf %10, %11 : vector<8x64xf32>
    %13 = math.tanh %12 : vector<8x64xf32>
    %cst_13 = arith.constant dense<0.000000e+00> : vector<8x4xf32>
    %14 = tpu.matmul %13, %3, %cst_13 {dimension_numbers = #tpu.dot_dimension_numbers<[1], [0], [0], [1], [0, 0, 1, 1], [], []>, precision = #tpu.contract_precision<fp32>} : vector<8x64xf32>, vector<64x4xf32>, vector<8x4xf32> -> vector<8x4xf32>
    %15 = vector.broadcast %5 : vector<1x4xf32> to vector<8x4xf32>
    %16 = arith.addf %14, %15 : vector<8x4xf32>
    %17 = math.tanh %16 : vector<8x4xf32>
    %18 = tpu.transpose %17, [1, 0] : vector<8x4xf32> -> vector<4x8xf32>
    %cst_14 = arith.constant dense<0.000000e+00> : vector<1x8xf32>
    %19 = tpu.matmul %6, %18, %cst_14 {dimension_numbers = #tpu.dot_dimension_numbers<[1], [0], [0], [1], [0, 0, 1, 1], [], []>, precision = #tpu.contract_precision<fp32>} : vector<1x4xf32>, vector<4x8xf32>, vector<1x8xf32> -> vector<1x8xf32>
    %20 = vector.broadcast %7 : vector<1x1xf32> to vector<1x8xf32>
    %21 = arith.mulf %20, %9 : vector<1x8xf32>
    %22 = arith.addf %19, %21 : vector<1x8xf32>
    %23 = vector.broadcast %8 : vector<1x1xf32> to vector<1x8xf32>
    %24 = arith.addf %22, %23 : vector<1x8xf32>
    %cst_15 = arith.constant dense<0xFF800000> : vector<1xf32>
    %25 = vector.multi_reduction <maximumf>, %24, %cst_15 [1] : vector<1x8xf32> to vector<1xf32>
    %26 = vector.shape_cast %25 : vector<1xf32> to vector<1x1xf32>
    %cst_16 = arith.constant 1.000000e+00 : f32
    %27 = vector.broadcast %cst_16 : f32 to vector<1x1xf32>
    %28 = arith.maximumf %26, %27 : vector<1x1xf32>
    %29 = vector.broadcast %28 : vector<1x1xf32> to vector<1x8xf32>
    %30 = arith.subf %24, %29 : vector<1x8xf32>
    %31 = math.exp %30 : vector<1x8xf32>
    %cst_17 = arith.constant 1.000000e+00 : f32
    %32 = vector.broadcast %cst_17 : f32 to vector<1x1xf32>
    %33 = arith.subf %32, %28 : vector<1x1xf32>
    %34 = math.exp %33 : vector<1x1xf32>
    %cst_18 = arith.constant dense<0.000000e+00> : vector<1xf32>
    %35 = vector.multi_reduction <add>, %31, %cst_18 [1] : vector<1x8xf32> to vector<1xf32>
    %36 = vector.shape_cast %35 : vector<1xf32> to vector<1x1xf32>
    %37 = arith.addf %34, %36 : vector<1x1xf32>
    %38 = tpu.concatenate %34, %31 in 1 : vector<1x1xf32>, vector<1x8xf32> -> vector<1x9xf32>
    %39 = vector.broadcast %37 : vector<1x1xf32> to vector<1x9xf32>
    %40 = arith.divf %38, %39 : vector<1x9xf32>
    %c0_19 = arith.constant 0 : index
    %c0_20 = arith.constant 0 : index
    %c0_21 = arith.constant 0 : index
    %41 = vector.load %arg5[%c0_19, %c0_20, %c0_21] : memref<1x1x9xf32, #tpu.memory_space<vmem>>, vector<1x1x9xf32>
    %42 = vector.shape_cast %41 : vector<1x1x9xf32> to vector<1x9xf32>
    %43 = vector.shape_cast %40 : vector<1x9xf32> to vector<1x1x9xf32>
    tpu.vector_store %arg5[%c0_19, %c0_20, %c0_21], %43 {strides = array<i32>} : memref<1x1x9xf32, #tpu.memory_space<vmem>>, vector<1x1x9xf32>,
    return
  }
  func.func @transform_0(%arg0: i32) -> (i32, i32, i32) {
    %c0_i32 = arith.constant 0 : i32
    %c0_i32_0 = arith.constant 0 : i32
    %c0_i32_1 = arith.constant 0 : i32
    return %arg0, %c0_i32, %c0_i32_0 : i32, i32, i32
  }
  func.func @transform_1(%arg0: i32) -> (i32, i32) {
    %c0_i32 = arith.constant 0 : i32
    %c0_i32_0 = arith.constant 0 : i32
    %c0_i32_1 = arith.constant 0 : i32
    return %c0_i32, %c0_i32_0 : i32, i32
  }
  func.func @transform_2(%arg0: i32) -> (i32, i32) {
    %c0_i32 = arith.constant 0 : i32
    %c0_i32_0 = arith.constant 0 : i32
    %c0_i32_1 = arith.constant 0 : i32
    return %c0_i32, %c0_i32_0 : i32, i32
  }
  func.func @transform_3(%arg0: i32) -> (i32, i32) {
    %c0_i32 = arith.constant 0 : i32
    %c0_i32_0 = arith.constant 0 : i32
    %c0_i32_1 = arith.constant 0 : i32
    return %c0_i32, %c0_i32_0 : i32, i32
  }
  func.func @transform_4(%arg0: i32) -> (i32, i32, i32) {
    %c0_i32 = arith.constant 0 : i32
    %c0_i32_0 = arith.constant 0 : i32
    %c0_i32_1 = arith.constant 0 : i32
    return %arg0, %c0_i32, %c0_i32_0 : i32, i32, i32
  }
}

</mosaic_0001>

<llo_original>
// kernel: tpu_custom_call.1
$region0: #{tpu_custom_call.1}
  #allocation0 [shape = 'u32[]', space=smem, size = 0x4, offset = 0x4, fixed_abs, tag = 'smem constant byte address 0x4 - core index']
  #allocation1 [shape = 'u32[72,128]{1,0:T(1,128)}', space=vmem, size = 0x9000, scoped, tag = 'internal scratch']
  %s0 = inlined_call_operand.hbm [shape: f32[4,8,64], index: 0, kind: input, shape index: {}]
  %s1 = inlined_call_operand.vmem [shape: f32[64,64], index: 1, kind: input, shape index: {}]
  %s2 = inlined_call_operand.vmem [shape: f32[64,4], index: 2, kind: input, shape index: {}]
  %s3 = inlined_call_operand.vmem [shape: f32[4,64], index: 3, kind: input, shape index: {}]
  %s4 = inlined_call_operand.hbm [shape: f32[4,1,9], index: 4, kind: output, shape index: {}]
  %s5 = sld [smem:[#allocation0]]
  $region53: #{tpu_custom_call.1} parent=0
    _
  %s7 = ssub.s32 1, %s5
  %s8 = scalar_select 0, %s7, %s5
  $region1: #{tpu_custom_call.1} parent=0
    #allocation2 [shape = 'u8[8192]{0}', space=vmem, size = 0x2000, scoped, tag = 'input window, operand 0']
    #allocation3 [shape = 's32[2]{0}', space=sflag, size = 0x8, scoped, tag = 'scoped memory for tpu_custom_call.1']
    #allocation4 [shape = 's32[2]{0}', space=sflag, size = 0x8, scoped, tag = 'scoped memory for tpu_custom_call.1']
    #allocation5 [shape = 'u8[1024]{0}', space=vmem, size = 0x400, scoped, tag = 'output window, operand 0']
    %9 = vsyncpa [#allocation3], 0
    %s10 = scalar_lea.sflag [#allocation3], 1
    %11 = vsyncpa %s10, 0
    %12 = vsyncpa [#allocation4], 0
    %s13 = scalar_lea.sflag [#allocation4], 1
    %14 = vsyncpa %s13, 0
    loop: start=0, step=1, limit=6
    $region2: #{tpu_custom_call.1} parent=1 // loop_pre_header
      _
    $region3: #{tpu_custom_call.1} parent=1 // loop_header
      %s16 = sphi 0, %s20
      %p17 = scmp.ge.s32.totalorder %s16, 6
      %s26 = sphi 0, %s28
      %s29 = sphi 0, %s26
      %s30 = sphi 0, %s29
      %s46 = sphi 0, %s30
      %s50 = sphi 0, %s50
      %s52 = sphi 0, %s50
      %s53 = sphi 0, %s52
      %s67 = sphi 0, %s53
      %s71 = sphi 0, %s71
      %s73 = sphi 0, %s71
      %s74 = sphi 0, %s73
      %s88 = sphi 0, %s74
      %s92 = sphi 0, %s92
      %s94 = sphi 0, %s92
      %s95 = sphi 0, %s94
      %s109 = sphi 0, %s95
      %s115 = sphi 0, %s117
      %s118 = sphi 0, %s115
      %s119 = sphi 0, %s118
      %s135 = sphi 0, %s119
    $region4: #{tpu_custom_call.1} parent=1 // loop_header_branch
      %19 = sbr.rel (%p17) target = $region8
    $region5: #{tpu_custom_call.1} parent=1 // loop_body
      %s21 = ssub.s32 %s16, 1
      %s22 = ssub.s32 %s16, 2
      %s23 = sadd.s32 %s16, 1
      %s24 = ssub.s32 %s16, %s23
      %p25 = scmp.eq.s32.totalorder %s24, 0
      %s27 = sadd.s32 %s26, 1
      %s28 = scalar_select %p25, %s26, %s27
      %p31 = pneg %p25
      %p32 = scmp.eq.s32.totalorder %s16, 3
      %p33 = por %p31, %p32
      %p34 = scmp.ne.s32.totalorder %s26, %s29
      %p35 = scmp.eq.s32.totalorder %s16, 0
      %p36 = por %p34, %p35
      %p37 = scmp.ne.s32.totalorder %s26, %s29
      %p38 = scmp.eq.s32.totalorder %s21, 3
      %p39 = por %p37, %p38
      %p40 = scmp.ne.s32.totalorder %s29, %s30
      %p41 = scmp.eq.s32.totalorder %s21, 0
      %p42 = por %p40, %p41
      %p43 = scmp.ne.s32.totalorder %s29, %s30
      %p44 = scmp.eq.s32.totalorder %s22, 3
      %p45 = por %p43, %p44
      %p47 = scmp.ne.s32.totalorder %s30, %s46
      %p48 = scmp.eq.s32.totalorder %s22, 0
      %p49 = por %p47, %p48
      %s51 = sadd.s32 %s50, 1
      %p54 = scmp.eq.s32.totalorder %s16, 3
      %p55 = scmp.ne.s32.totalorder %s50, %s52
      %p56 = scmp.eq.s32.totalorder %s16, 0
      %p57 = por %p55, %p56
      %p58 = scmp.ne.s32.totalorder %s50, %s52
      %p59 = scmp.eq.s32.totalorder %s21, 3
      %p60 = por %p58, %p59
      %p61 = scmp.ne.s32.totalorder %s52, %s53
      %p62 = scmp.eq.s32.totalorder %s21, 0
      %p63 = por %p61, %p62
      %p64 = scmp.ne.s32.totalorder %s52, %s53
      %p65 = scmp.eq.s32.totalorder %s22, 3
      %p66 = por %p64, %p65
      %p68 = scmp.ne.s32.totalorder %s53, %s67
      %p69 = scmp.eq.s32.totalorder %s22, 0
      %p70 = por %p68, %p69
      %s72 = sadd.s32 %s71, 1
      %p75 = scmp.eq.s32.totalorder %s16, 3
      %p76 = scmp.ne.s32.totalorder %s71, %s73
      %p77 = scmp.eq.s32.totalorder %s16, 0
      %p78 = por %p76, %p77
      %p79 = scmp.ne.s32.totalorder %s71, %s73
      %p80 = scmp.eq.s32.totalorder %s21, 3
      %p81 = por %p79, %p80
      %p82 = scmp.ne.s32.totalorder %s73, %s74
      %p83 = scmp.eq.s32.totalorder %s21, 0
      %p84 = por %p82, %p83
      %p85 = scmp.ne.s32.totalorder %s73, %s74
      %p86 = scmp.eq.s32.totalorder %s22, 3
      %p87 = por %p85, %p86
      %p89 = scmp.ne.s32.totalorder %s74, %s88
      %p90 = scmp.eq.s32.totalorder %s22, 0
      %p91 = por %p89, %p90
      %s93 = sadd.s32 %s92, 1
      %p96 = scmp.eq.s32.totalorder %s16, 3
      %p97 = scmp.ne.s32.totalorder %s92, %s94
      %p98 = scmp.eq.s32.totalorder %s16, 0
      %p99 = por %p97, %p98
      %p100 = scmp.ne.s32.totalorder %s92, %s94
      %p101 = scmp.eq.s32.totalorder %s21, 3
      %p102 = por %p100, %p101
      %p103 = scmp.ne.s32.totalorder %s94, %s95
      %p104 = scmp.eq.s32.totalorder %s21, 0
      %p105 = por %p103, %p104
      %p106 = scmp.ne.s32.totalorder %s94, %s95
      %p107 = scmp.eq.s32.totalorder %s22, 3
      %p108 = por %p106, %p107
      %p110 = scmp.ne.s32.totalorder %s95, %s109
      %p111 = scmp.eq.s32.totalorder %s22, 0
      %p112 = por %p110, %p111
      %s113 = ssub.s32 %s16, %s23
      %p114 = scmp.eq.s32.totalorder %s113, 0
      %s116 = sadd.s32 %s115, 1
      %s117 = scalar_select %p114, %s115, %s116
      %p120 = pneg %p114
      %p121 = scmp.eq.s32.totalorder %s16, 3
      %p122 = por %p120, %p121
      %p123 = scmp.ne.s32.totalorder %s115, %s118
      %p124 = scmp.eq.s32.totalorder %s16, 0
      %p125 = por %p123, %p124
      %p126 = scmp.ne.s32.totalorder %s115, %s118
      %p127 = scmp.eq.s32.totalorder %s21, 3
      %p128 = por %p126, %p127
      %p129 = scmp.ne.s32.totalorder %s118, %s119
      %p130 = scmp.eq.s32.totalorder %s21, 0
      %p131 = por %p129, %p130
      %p132 = scmp.ne.s32.totalorder %s118, %s119
      %p133 = scmp.eq.s32.totalorder %s22, 3
      %p134 = por %p132, %p133
      %p136 = scmp.ne.s32.totalorder %s119, %s135
      %p137 = scmp.eq.s32.totalorder %s22, 0
      %p138 = por %p136, %p137
      %p139 = scmp.le.s32.totalorder 1, %s16
      %p140 = scmp.lt.s32.totalorder %s16, 5
      %p141 = pnand %p139, %p140
      %p142 = pneg %p141
      // Predicated region
      $region9: #{tpu_custom_call.1} parent=5 // pred_check
        _
      $region10: #{tpu_custom_call.1} parent=5 // pred_check_branch
        %144 = sbr.rel (%p141) target = $region12
      $region11: #{tpu_custom_call.1} parent=5 // pred_region
        %s145 = ssub.s32 %s16, 1
        // Predicated region
        $region13: #{tpu_custom_call.1} parent=11 // pred_check
          %p146 = pneg %p63
        $region14: #{tpu_custom_call.1} parent=11 // pred_check_branch
          %148 = sbr.rel (%p146) target = $region16
        $region15: #{tpu_custom_call.1} parent=11 // pred_region
          _
        $region16: #{tpu_custom_call.1} parent=11 // pred_fallthru
          _
        // Predicated region
        $region17: #{tpu_custom_call.1} parent=11 // pred_check
          %p149 = pneg %p84
        $region18: #{tpu_custom_call.1} parent=11 // pred_check_branch
          %151 = sbr.rel (%p149) target = $region20
        $region19: #{tpu_custom_call.1} parent=11 // pred_region
          _
        $region20: #{tpu_custom_call.1} parent=11 // pred_fallthru
          _
        // Predicated region
        $region21: #{tpu_custom_call.1} parent=11 // pred_check
          %p152 = pneg %p105
        $region22: #{tpu_custom_call.1} parent=11 // pred_check_branch
          %154 = sbr.rel (%p152) target = $region24
        $region23: #{tpu_custom_call.1} parent=11 // pred_region
          _
        $region24: #{tpu_custom_call.1} parent=11 // pred_fallthru
          _
      $region12: #{tpu_custom_call.1} parent=5 // pred_fallthru
        _
      %p155 = scmp.lt.s32.totalorder %s16, 4
      // Predicated region
      $region25: #{tpu_custom_call.1} parent=5 // pred_check
        %p156 = pneg %p155
      $region26: #{tpu_custom_call.1} parent=5 // pred_check_branch
        %158 = sbr.rel (%p156) target = $region28
      $region27: #{tpu_custom_call.1} parent=5 // pred_region
        // Predicated region
        $region29: #{tpu_custom_call.1} parent=27 // pred_check
          %p159 = pneg %p36
        $region30: #{tpu_custom_call.1} parent=27 // pred_check_branch
          %161 = sbr.rel (%p159) target = $region32
        $region31: #{tpu_custom_call.1} parent=27 // pred_region
          %s162 = sand.u32 %s26, 1
          %s163 = scalar_lea.sflag [#allocation3], %s162
          %s164 = sand.u32 %s26, 1
          %s165 = smul.addr %s164, 8
          %s166 = scalar_lea.vmem [#allocation2], %s165
          %168 = vsyncadd %s163, 0
          %s169 = smul.addr %s16, 8
          %s170 = scalar_lea.hbm %s0, %s169
          %s172 = sshll.u32 %s170, 4
          %s173 = int_to_ptr.hbm [resolvable:$true] %s172
          %s174 = sshll.u32 %s166, 4
          %s175 = int_to_ptr.vmem [resolvable:$true] %s174
          %177 = dma.hbm_to_vmem [thread:$0]  %s173, 128, %s175, %s163
        $region32: #{tpu_custom_call.1} parent=27 // pred_fallthru
          _
      $region28: #{tpu_custom_call.1} parent=5 // pred_fallthru
        _
      %p178 = scmp.le.s32.totalorder 1, %s16
      %p179 = scmp.lt.s32.totalorder %s16, 5
      %p180 = pnand %p178, %p179
      %p181 = pneg %p180
      // Predicated region
      $region33: #{tpu_custom_call.1} parent=5 // pred_check
        _
      $region34: #{tpu_custom_call.1} parent=5 // pred_check_branch
        %183 = sbr.rel (%p180) target = $region36
      $region35: #{tpu_custom_call.1} parent=5 // pred_region
        %s184 = ssub.s32 %s16, 1
        %s185 = sand.u32 %s29, 1
        %s186 = scalar_lea.sflag [#allocation3], %s185
        %s187 = sand.u32 %s29, 1
        %s188 = smul.addr %s187, 8
        %s189 = scalar_lea.vmem [#allocation2], %s188
        // Predicated region
        $region37: #{tpu_custom_call.1} parent=35 // pred_check
          %p190 = pneg %p42
        $region38: #{tpu_custom_call.1} parent=35 // pred_check_branch
          %192 = sbr.rel (%p190) target = $region40
        $region39: #{tpu_custom_call.1} parent=35 // pred_region
          %194 = dma.done %s186, 128
        $region40: #{tpu_custom_call.1} parent=35 // pred_fallthru
          _
        %s195 = sand.u32 %s29, 1
        %s196 = scalar_lea.sflag [#allocation3], %s195
        %s197 = sand.u32 %s29, 1
        %s198 = smul.addr %s197, 8
        %s199 = scalar_lea.vmem [#allocation2], %s198
        %p200 = pneg %p42
        %p201 = pneg %p39
        %p202 = pneg %p63
        %p203 = pneg %p60
        %p204 = pneg %p84
        %p205 = pneg %p81
        %p206 = pneg %p105
        %p207 = pneg %p102
        %p208 = pneg %p131
        %p209 = pneg %p128
        %s210 = sand.u32 %s118, 1
        %s211 = scalar_lea.sflag [#allocation4], %s210
        %s212 = sand.u32 %s118, 1
        %s213 = scalar_lea.vmem [#allocation5], %s212
        %v214 = vld [vmem:[%s189] sm:$0xff]
        %v215 = vld [vmem:[%s1] sm:$0xff]
        %v216 = vld [vmem:[%s1 + $0x8] sm:$0xff]
        %v217 = vld [vmem:[%s1 + $0x10] sm:$0xff]
        %v218 = vld [vmem:[%s1 + $0x18] sm:$0xff]
        %v219 = vld [vmem:[%s1 + $0x20] sm:$0xff]
        %v220 = vld [vmem:[%s1 + $0x28] sm:$0xff]
        %v221 = vld [vmem:[%s1 + $0x30] sm:$0xff]
        %v222 = vld [vmem:[%s1 + $0x38] sm:$0xff]
        %v223 = vld [vmem:[%s2] sm:$0xff]
        %v224 = vld [vmem:[%s2 + $0x8] sm:$0xff]
        %v225 = vld [vmem:[%s2 + $0x10] sm:$0xff]
        %v226 = vld [vmem:[%s2 + $0x18] sm:$0xff]
        %v227 = vld [vmem:[%s2 + $0x20] sm:$0xff]
        %v228 = vld [vmem:[%s2 + $0x28] sm:$0xff]
        %v229 = vld [vmem:[%s2 + $0x30] sm:$0xff]
        %v230 = vld [vmem:[%s2 + $0x38] sm:$0xff]
        %v231 = vld [vmem:[%s3] sm:$0x1]
        %v232 = vld [vmem:[%s3 + $0x1] sm:$0x1]
        %v233 = vld [vmem:[%s3 + $0x2] sm:$0x1]
        %v234 = vld [vmem:[%s3 + $0x3] sm:$0x1]
        %v235 = vperm.slane %v231, 0
        %vm236 = vcmask 523264
        %v238 = vsel %vm236, %v214, 0
        %240 = vmatpush.msra.mxu0 0.0
        %241 = vmatpush.msra.mxu0 0.0
        %242 = vmatpush.msra.mxu0 0.0
        %243 = vmatpush.msra.mxu0 0.0
        %244 = vmatpush.msra.mxu0 0.0
        %245 = vmatpush.msra.mxu0 0.0
        %246 = vmatpush.msra.mxu0 0.0
        %247 = vmatpush.msra.mxu0 0.0
        %v248 = vand.u32 %v222, 4294901760
        %249 = vmatpush.msra.mxu0 %v248
        %v250 = vand.u32 %v221, 4294901760
        %251 = vmatpush.msra.mxu0 %v250
        %v252 = vand.u32 %v220, 4294901760
        %253 = vmatpush.msra.mxu0 %v252
        %v254 = vand.u32 %v219, 4294901760
        %255 = vmatpush.msra.mxu0 %v254
        %v256 = vand.u32 %v218, 4294901760
        %257 = vmatpush.msra.mxu0 %v256
        %v258 = vand.u32 %v217, 4294901760
        %259 = vmatpush.msra.mxu0 %v258
        %v260 = vand.u32 %v216, 4294901760
        %261 = vmatpush.msra.mxu0 %v260
        %v262 = vand.u32 %v215, 4294901760
        %263 = vmatpush.msra.mxu0 %v262
        %v264 = vand.u32 %v238, 4294901760
        %v265 = vsub.f32 %v238, %v264
        %v266 = vand.u32 %v265, 4294901760
        %v267 = vsub.f32 %v265, %v266
        %v268 = vand.u32 %v267, 4294901760
        %269 = vmatmul.f32.gmra.mxu0 %v268
        %v270 = vpop.f32.mrf.mxu0
        %v271 = vadd.f32 %v235, %v270
        %272 = vdwg.mxu0
        %273 = vmatpush.msra.mxu0 0.0
        %274 = vmatpush.msra.mxu0 0.0
        %275 = vmatpush.msra.mxu0 0.0
        %276 = vmatpush.msra.mxu0 0.0
        %277 = vmatpush.msra.mxu0 0.0
        %278 = vmatpush.msra.mxu0 0.0
        %279 = vmatpush.msra.mxu0 0.0
        %280 = vmatpush.msra.mxu0 0.0
        %v281 = vand.u32 %v222, 4294901760
        %v282 = vsub.f32 %v222, %v281
        %v283 = vand.u32 %v282, 4294901760
        %v284 = vsub.f32 %v282, %v283
        %v285 = vand.u32 %v284, 4294901760
        %286 = vmatpush.msra.mxu0 %v285
        %v287 = vand.u32 %v221, 4294901760
        %v288 = vsub.f32 %v221, %v287
        %v289 = vand.u32 %v288, 4294901760
        %v290 = vsub.f32 %v288, %v289
        %v291 = vand.u32 %v290, 4294901760
        %292 = vmatpush.msra.mxu0 %v291
        %v293 = vand.u32 %v220, 4294901760
        %v294 = vsub.f32 %v220, %v293
        %v295 = vand.u32 %v294, 4294901760
        %v296 = vsub.f32 %v294, %v295
        %v297 = vand.u32 %v296, 4294901760
        %298 = vmatpush.msra.mxu0 %v297
        %v299 = vand.u32 %v219, 4294901760
        %v300 = vsub.f32 %v219, %v299
        %v301 = vand.u32 %v300, 4294901760
        %v302 = vsub.f32 %v300, %v301
        %v303 = vand.u32 %v302, 4294901760
        %304 = vmatpush.msra.mxu0 %v303
        %v305 = vand.u32 %v218, 4294901760
        %v306 = vsub.f32 %v218, %v305
        %v307 = vand.u32 %v306, 4294901760
        %v308 = vsub.f32 %v306, %v307
        %v309 = vand.u32 %v308, 4294901760
        %310 = vmatpush.msra.mxu0 %v309
        %v311 = vand.u32 %v217, 4294901760
        %v312 = vsub.f32 %v217, %v311
        %v313 = vand.u32 %v312, 4294901760
        %v314 = vsub.f32 %v312, %v313
        %v315 = vand.u32 %v314, 4294901760
        %316 = vmatpush.msra.mxu0 %v315
        %v317 = vand.u32 %v216, 4294901760
        %v318 = vsub.f32 %v216, %v317
        %v319 = vand.u32 %v318, 4294901760
        %v320 = vsub.f32 %v318, %v319
        %v321 = vand.u32 %v320, 4294901760
        %322 = vmatpush.msra.mxu0 %v321
        %v323 = vand.u32 %v215, 4294901760
        %v324 = vsub.f32 %v215, %v323
        %v325 = vand.u32 %v324, 4294901760
        %v326 = vsub.f32 %v324, %v325
        %v327 = vand.u32 %v326, 4294901760
        %328 = vmatpush.msra.mxu0 %v327
        %v329 = vand.u32 %v238, 4294901760
        %330 = vmatmul.f32.gmra.mxu0 %v329
        %v331 = vpop.f32.mrf.mxu0
        %v332 = vadd.f32 %v271, %v331
        %333 = vdwg.mxu0
        %334 = vmatpush.msra.mxu0 0.0
        %335 = vmatpush.msra.mxu0 0.0
        %336 = vmatpush.msra.mxu0 0.0
        %337 = vmatpush.msra.mxu0 0.0
        %338 = vmatpush.msra.mxu0 0.0
        %339 = vmatpush.msra.mxu0 0.0
        %340 = vmatpush.msra.mxu0 0.0
        %341 = vmatpush.msra.mxu0 0.0
        %v342 = vand.u32 %v222, 4294901760
        %v343 = vsub.f32 %v222, %v342
        %344 = vmatpush.msra.mxu0 %v343
        %v345 = vand.u32 %v221, 4294901760
        %v346 = vsub.f32 %v221, %v345
        %347 = vmatpush.msra.mxu0 %v346
        %v348 = vand.u32 %v220, 4294901760
        %v349 = vsub.f32 %v220, %v348
        %350 = vmatpush.msra.mxu0 %v349
        %v351 = vand.u32 %v219, 4294901760
        %v352 = vsub.f32 %v219, %v351
        %353 = vmatpush.msra.mxu0 %v352
        %v354 = vand.u32 %v218, 4294901760
        %v355 = vsub.f32 %v218, %v354
        %356 = vmatpush.msra.mxu0 %v355
        %v357 = vand.u32 %v217, 4294901760
        %v358 = vsub.f32 %v217, %v357
        %359 = vmatpush.msra.mxu0 %v358
        %v360 = vand.u32 %v216, 4294901760
        %v361 = vsub.f32 %v216, %v360
        %362 = vmatpush.msra.mxu0 %v361
        %v363 = vand.u32 %v215, 4294901760
        %v364 = vsub.f32 %v215, %v363
        %365 = vmatpush.msra.mxu0 %v364
        %v366 = vand.u32 %v238, 4294901760
        %v367 = vsub.f32 %v238, %v366
        %368 = vmatmul.f32.gmra.mxu0 %v367
        %v369 = vpop.f32.mrf.mxu0
        %v370 = vadd.f32 %v332, %v369
        %371 = vdwg.mxu0
        %372 = vmatpush.msra.mxu0 0.0
        %373 = vmatpush.msra.mxu0 0.0
        %374 = vmatpush.msra.mxu0 0.0
        %375 = vmatpush.msra.mxu0 0.0
        %376 = vmatpush.msra.mxu0 0.0
        %377 = vmatpush.msra.mxu0 0.0
        %378 = vmatpush.msra.mxu0 0.0
        %379 = vmatpush.msra.mxu0 0.0
        %v380 = vand.u32 %v222, 4294901760
        %381 = vmatpush.msra.mxu0 %v380
        %v382 = vand.u32 %v221, 4294901760
        %383 = vmatpush.msra.mxu0 %v382
        %v384 = vand.u32 %v220, 4294901760
        %385 = vmatpush.msra.mxu0 %v384
        %v386 = vand.u32 %v219, 4294901760
        %387 = vmatpush.msra.mxu0 %v386
        %v388 = vand.u32 %v218, 4294901760
        %389 = vmatpush.msra.mxu0 %v388
        %v390 = vand.u32 %v217, 4294901760
        %391 = vmatpush.msra.mxu0 %v390
        %v392 = vand.u32 %v216, 4294901760
        %393 = vmatpush.msra.mxu0 %v392
        %v394 = vand.u32 %v215, 4294901760
        %395 = vmatpush.msra.mxu0 %v394
        %v396 = vand.u32 %v238, 4294901760
        %v397 = vsub.f32 %v238, %v396
        %v398 = vand.u32 %v397, 4294901760
        %399 = vmatmul.f32.gmra.mxu0 %v398
        %v400 = vpop.f32.mrf.mxu0
        %v401 = vadd.f32 %v370, %v400
        %402 = vdwg.mxu0
        %403 = vmatpush.msra.mxu0 0.0
        %404 = vmatpush.msra.mxu0 0.0
        %405 = vmatpush.msra.mxu0 0.0
        %406 = vmatpush.msra.mxu0 0.0
        %407 = vmatpush.msra.mxu0 0.0
        %408 = vmatpush.msra.mxu0 0.0
        %409 = vmatpush.msra.mxu0 0.0
        %410 = vmatpush.msra.mxu0 0.0
        %v411 = vand.u32 %v222, 4294901760
        %v412 = vsub.f32 %v222, %v411
        %v413 = vand.u32 %v412, 4294901760
        %414 = vmatpush.msra.mxu0 %v413
        %v415 = vand.u32 %v221, 4294901760
        %v416 = vsub.f32 %v221, %v415
        %v417 = vand.u32 %v416, 4294901760
        %418 = vmatpush.msra.mxu0 %v417
        %v419 = vand.u32 %v220, 4294901760
        %v420 = vsub.f32 %v220, %v419
        %v421 = vand.u32 %v420, 4294901760
        %422 = vmatpush.msra.mxu0 %v421
        %v423 = vand.u32 %v219, 4294901760
        %v424 = vsub.f32 %v219, %v423
        %v425 = vand.u32 %v424, 4294901760
        %426 = vmatpush.msra.mxu0 %v425
        %v427 = vand.u32 %v218, 4294901760
        %v428 = vsub.f32 %v218, %v427
        %v429 = vand.u32 %v428, 4294901760
        %430 = vmatpush.msra.mxu0 %v429
        %v431 = vand.u32 %v217, 4294901760
        %v432 = vsub.f32 %v217, %v431
        %v433 = vand.u32 %v432, 4294901760
        %434 = vmatpush.msra.mxu0 %v433
        %v435 = vand.u32 %v216, 4294901760
        %v436 = vsub.f32 %v216, %v435
        %v437 = vand.u32 %v436, 4294901760
        %438 = vmatpush.msra.mxu0 %v437
        %v439 = vand.u32 %v215, 4294901760
        %v440 = vsub.f32 %v215, %v439
        %v441 = vand.u32 %v440, 4294901760
        %442 = vmatpush.msra.mxu0 %v441
        %v443 = vand.u32 %v238, 4294901760
        %444 = vmatmul.f32.gmra.mxu0 %v443
        %v445 = vpop.f32.mrf.mxu0
        %v446 = vadd.f32 %v401, %v445
        %447 = vdwg.mxu0
        %448 = vmatpush.msra.mxu0 0.0
        %449 = vmatpush.msra.mxu0 0.0
        %450 = vmatpush.msra.mxu0 0.0
        %451 = vmatpush.msra.mxu0 0.0
        %452 = vmatpush.msra.mxu0 0.0
        %453 = vmatpush.msra.mxu0 0.0
        %454 = vmatpush.msra.mxu0 0.0
        %455 = vmatpush.msra.mxu0 0.0
        %v456 = vand.u32 %v222, 4294901760
        %457 = vmatpush.msra.mxu0 %v456
        %v458 = vand.u32 %v221, 4294901760
        %459 = vmatpush.msra.mxu0 %v458
        %v460 = vand.u32 %v220, 4294901760
        %461 = vmatpush.msra.mxu0 %v460
        %v462 = vand.u32 %v219, 4294901760
        %463 = vmatpush.msra.mxu0 %v462
        %v464 = vand.u32 %v218, 4294901760
        %465 = vmatpush.msra.mxu0 %v464
        %v466 = vand.u32 %v217, 4294901760
        %467 = vmatpush.msra.mxu0 %v466
        %v468 = vand.u32 %v216, 4294901760
        %469 = vmatpush.msra.mxu0 %v468
        %v470 = vand.u32 %v215, 4294901760
        %471 = vmatpush.msra.mxu0 %v470
        %v472 = vand.u32 %v238, 4294901760
        %473 = vmatmul.f32.gmra.mxu0 %v472
        %v474 = vpop.f32.mrf.mxu0
        %v475 = vadd.f32 %v446, %v474
        %476 = vdwg.mxu0
        %v477 = vtanh.pop %v475
        %v478 = vperm.slane %v232, 0
        %v480 = vsel %vm236, %v477, 0
        %482 = vmatpush.msra.mxu0 0.0
        %483 = vmatpush.msra.mxu0 0.0
        %484 = vmatpush.msra.mxu0 0.0
        %485 = vmatpush.msra.mxu0 0.0
        %486 = vmatpush.msra.mxu0 0.0
        %487 = vmatpush.msra.mxu0 0.0
        %488 = vmatpush.msra.mxu0 0.0
        %489 = vmatpush.msra.mxu0 0.0
        %v490 = vand.u32 %v230, 4294901760
        %491 = vmatpush.msra.mxu0 %v490
        %v492 = vand.u32 %v229, 4294901760
        %493 = vmatpush.msra.mxu0 %v492
        %v494 = vand.u32 %v228, 4294901760
        %495 = vmatpush.msra.mxu0 %v494
        %v496 = vand.u32 %v227, 4294901760
        %497 = vmatpush.msra.mxu0 %v496
        %v498 = vand.u32 %v226, 4294901760
        %499 = vmatpush.msra.mxu0 %v498
        %v500 = vand.u32 %v225, 4294901760
        %501 = vmatpush.msra.mxu0 %v500
        %v502 = vand.u32 %v224, 4294901760
        %503 = vmatpush.msra.mxu0 %v502
        %v504 = vand.u32 %v223, 4294901760
        %505 = vmatpush.msra.mxu0 %v504
        %v506 = vand.u32 %v480, 4294901760
        %v507 = vsub.f32 %v480, %v506
        %v508 = vand.u32 %v507, 4294901760
        %v509 = vsub.f32 %v507, %v508
        %v510 = vand.u32 %v509, 4294901760
        %511 = vmatmul.f32.gmra.mxu0 %v510
        %v512 = vpop.f32.mrf.mxu0
        %v513 = vadd.f32 %v478, %v512
        %514 = vdwg.mxu0
        %515 = vmatpush.msra.mxu0 0.0
        %516 = vmatpush.msra.mxu0 0.0
        %517 = vmatpush.msra.mxu0 0.0
        %518 = vmatpush.msra.mxu0 0.0
        %519 = vmatpush.msra.mxu0 0.0
        %520 = vmatpush.msra.mxu0 0.0
        %521 = vmatpush.msra.mxu0 0.0
        %522 = vmatpush.msra.mxu0 0.0
        %v523 = vand.u32 %v230, 4294901760
        %v524 = vsub.f32 %v230, %v523
        %v525 = vand.u32 %v524, 4294901760
        %v526 = vsub.f32 %v524, %v525
        %v527 = vand.u32 %v526, 4294901760
        %528 = vmatpush.msra.mxu0 %v527
        %v529 = vand.u32 %v229, 4294901760
        %v530 = vsub.f32 %v229, %v529
        %v531 = vand.u32 %v530, 4294901760
        %v532 = vsub.f32 %v530, %v531
        %v533 = vand.u32 %v532, 4294901760
        %534 = vmatpush.msra.mxu0 %v533
        %v535 = vand.u32 %v228, 4294901760
        %v536 = vsub.f32 %v228, %v535
        %v537 = vand.u32 %v536, 4294901760
        %v538 = vsub.f32 %v536, %v537
        %v539 = vand.u32 %v538, 4294901760
        %540 = vmatpush.msra.mxu0 %v539
        %v541 = vand.u32 %v227, 4294901760
        %v542 = vsub.f32 %v227, %v541
        %v543 = vand.u32 %v542, 4294901760
        %v544 = vsub.f32 %v542, %v543
        %v545 = vand.u32 %v544, 4294901760
        %546 = vmatpush.msra.mxu0 %v545
        %v547 = vand.u32 %v226, 4294901760
        %v548 = vsub.f32 %v226, %v547
        %v549 = vand.u32 %v548, 4294901760
        %v550 = vsub.f32 %v548, %v549
        %v551 = vand.u32 %v550, 4294901760
        %552 = vmatpush.msra.mxu0 %v551
        %v553 = vand.u32 %v225, 4294901760
        %v554 = vsub.f32 %v225, %v553
        %v555 = vand.u32 %v554, 4294901760
        %v556 = vsub.f32 %v554, %v555
        %v557 = vand.u32 %v556, 4294901760
        %558 = vmatpush.msra.mxu0 %v557
        %v559 = vand.u32 %v224, 4294901760
        %v560 = vsub.f32 %v224, %v559
        %v561 = vand.u32 %v560, 4294901760
        %v562 = vsub.f32 %v560, %v561
        %v563 = vand.u32 %v562, 4294901760
        %564 = vmatpush.msra.mxu0 %v563
        %v565 = vand.u32 %v223, 4294901760
        %v566 = vsub.f32 %v223, %v565
        %v567 = vand.u32 %v566, 4294901760
        %v568 = vsub.f32 %v566, %v567
        %v569 = vand.u32 %v568, 4294901760
        %570 = vmatpush.msra.mxu0 %v569
        %v571 = vand.u32 %v480, 4294901760
        %572 = vmatmul.f32.gmra.mxu0 %v571
        %v573 = vpop.f32.mrf.mxu0
        %v574 = vadd.f32 %v513, %v573
        %575 = vdwg.mxu0
        %576 = vmatpush.msra.mxu0 0.0
        %577 = vmatpush.msra.mxu0 0.0
        %578 = vmatpush.msra.mxu0 0.0
        %579 = vmatpush.msra.mxu0 0.0
        %580 = vmatpush.msra.mxu0 0.0
        %581 = vmatpush.msra.mxu0 0.0
        %582 = vmatpush.msra.mxu0 0.0
        %583 = vmatpush.msra.mxu0 0.0
        %v584 = vand.u32 %v230, 4294901760
        %v585 = vsub.f32 %v230, %v584
        %586 = vmatpush.msra.mxu0 %v585
        %v587 = vand.u32 %v229, 4294901760
        %v588 = vsub.f32 %v229, %v587
        %589 = vmatpush.msra.mxu0 %v588
        %v590 = vand.u32 %v228, 4294901760
        %v591 = vsub.f32 %v228, %v590
        %592 = vmatpush.msra.mxu0 %v591
        %v593 = vand.u32 %v227, 4294901760
        %v594 = vsub.f32 %v227, %v593
        %595 = vmatpush.msra.mxu0 %v594
        %v596 = vand.u32 %v226, 4294901760
        %v597 = vsub.f32 %v226, %v596
        %598 = vmatpush.msra.mxu0 %v597
        %v599 = vand.u32 %v225, 4294901760
        %v600 = vsub.f32 %v225, %v599
        %601 = vmatpush.msra.mxu0 %v600
        %v602 = vand.u32 %v224, 4294901760
        %v603 = vsub.f32 %v224, %v602
        %604 = vmatpush.msra.mxu0 %v603
        %v605 = vand.u32 %v223, 4294901760
        %v606 = vsub.f32 %v223, %v605
        %607 = vmatpush.msra.mxu0 %v606
        %v608 = vand.u32 %v480, 4294901760
        %v609 = vsub.f32 %v480, %v608
        %610 = vmatmul.f32.gmra.mxu0 %v609
        %v611 = vpop.f32.mrf.mxu0
        %v612 = vadd.f32 %v574, %v611
        %613 = vdwg.mxu0
        %614 = vmatpush.msra.mxu0 0.0
        %615 = vmatpush.msra.mxu0 0.0
        %616 = vmatpush.msra.mxu0 0.0
        %617 = vmatpush.msra.mxu0 0.0
        %618 = vmatpush.msra.mxu0 0.0
        %619 = vmatpush.msra.mxu0 0.0
        %620 = vmatpush.msra.mxu0 0.0
        %621 = vmatpush.msra.mxu0 0.0
        %v622 = vand.u32 %v230, 4294901760
        %623 = vmatpush.msra.mxu0 %v622
        %v624 = vand.u32 %v229, 4294901760
        %625 = vmatpush.msra.mxu0 %v624
        %v626 = vand.u32 %v228, 4294901760
        %627 = vmatpush.msra.mxu0 %v626
        %v628 = vand.u32 %v227, 4294901760
        %629 = vmatpush.msra.mxu0 %v628
        %v630 = vand.u32 %v226, 4294901760
        %631 = vmatpush.msra.mxu0 %v630
        %v632 = vand.u32 %v225, 4294901760
        %633 = vmatpush.msra.mxu0 %v632
        %v634 = vand.u32 %v224, 4294901760
        %635 = vmatpush.msra.mxu0 %v634
        %v636 = vand.u32 %v223, 4294901760
        %637 = vmatpush.msra.mxu0 %v636
        %v638 = vand.u32 %v480, 4294901760
        %v639 = vsub.f32 %v480, %v638
        %v640 = vand.u32 %v639, 4294901760
        %641 = vmatmul.f32.gmra.mxu0 %v640
        %v642 = vpop.f32.mrf.mxu0
        %v643 = vadd.f32 %v612, %v642
        %644 = vdwg.mxu0
        %645 = vmatpush.msra.mxu0 0.0
        %646 = vmatpush.msra.mxu0 0.0
        %647 = vmatpush.msra.mxu0 0.0
        %648 = vmatpush.msra.mxu0 0.0
        %649 = vmatpush.msra.mxu0 0.0
        %650 = vmatpush.msra.mxu0 0.0
        %651 = vmatpush.msra.mxu0 0.0
        %652 = vmatpush.msra.mxu0 0.0
        %v653 = vand.u32 %v230, 4294901760
        %v654 = vsub.f32 %v230, %v653
        %v655 = vand.u32 %v654, 4294901760
        %656 = vmatpush.msra.mxu0 %v655
        %v657 = vand.u32 %v229, 4294901760
        %v658 = vsub.f32 %v229, %v657
        %v659 = vand.u32 %v658, 4294901760
        %660 = vmatpush.msra.mxu0 %v659
        %v661 = vand.u32 %v228, 4294901760
        %v662 = vsub.f32 %v228, %v661
        %v663 = vand.u32 %v662, 4294901760
        %664 = vmatpush.msra.mxu0 %v663
        %v665 = vand.u32 %v227, 4294901760
        %v666 = vsub.f32 %v227, %v665
        %v667 = vand.u32 %v666, 4294901760
        %668 = vmatpush.msra.mxu0 %v667
        %v669 = vand.u32 %v226, 4294901760
        %v670 = vsub.f32 %v226, %v669
        %v671 = vand.u32 %v670, 4294901760
        %672 = vmatpush.msra.mxu0 %v671
        %v673 = vand.u32 %v225, 4294901760
        %v674 = vsub.f32 %v225, %v673
        %v675 = vand.u32 %v674, 4294901760
        %676 = vmatpush.msra.mxu0 %v675
        %v677 = vand.u32 %v224, 4294901760
        %v678 = vsub.f32 %v224, %v677
        %v679 = vand.u32 %v678, 4294901760
        %680 = vmatpush.msra.mxu0 %v679
        %v681 = vand.u32 %v223, 4294901760
        %v682 = vsub.f32 %v223, %v681
        %v683 = vand.u32 %v682, 4294901760
        %684 = vmatpush.msra.mxu0 %v683
        %v685 = vand.u32 %v480, 4294901760
        %686 = vmatmul.f32.gmra.mxu0 %v685
        %v687 = vpop.f32.mrf.mxu0
        %v688 = vadd.f32 %v643, %v687
        %689 = vdwg.mxu0
        %690 = vmatpush.msra.mxu0 0.0
        %691 = vmatpush.msra.mxu0 0.0
        %692 = vmatpush.msra.mxu0 0.0
        %693 = vmatpush.msra.mxu0 0.0
        %694 = vmatpush.msra.mxu0 0.0
        %695 = vmatpush.msra.mxu0 0.0
        %696 = vmatpush.msra.mxu0 0.0
        %697 = vmatpush.msra.mxu0 0.0
        %v698 = vand.u32 %v230, 4294901760
        %699 = vmatpush.msra.mxu0 %v698
        %v700 = vand.u32 %v229, 4294901760
        %701 = vmatpush.msra.mxu0 %v700
        %v702 = vand.u32 %v228, 4294901760
        %703 = vmatpush.msra.mxu0 %v702
        %v704 = vand.u32 %v227, 4294901760
        %705 = vmatpush.msra.mxu0 %v704
        %v706 = vand.u32 %v226, 4294901760
        %707 = vmatpush.msra.mxu0 %v706
        %v708 = vand.u32 %v225, 4294901760
        %709 = vmatpush.msra.mxu0 %v708
        %v710 = vand.u32 %v224, 4294901760
        %711 = vmatpush.msra.mxu0 %v710
        %v712 = vand.u32 %v223, 4294901760
        %713 = vmatpush.msra.mxu0 %v712
        %v714 = vand.u32 %v480, 4294901760
        %715 = vmatmul.f32.gmra.mxu0 %v714
        %v716 = vpop.f32.mrf.mxu0
        %v717 = vadd.f32 %v688, %v716
        %718 = vdwg.mxu0
        %v719 = vtanh.pop %v717
        %721 = vset.pattern.permute.xlu0 4
        %722 = vperm.xlu0 %721, %v233
        %v723 = vpop.permute.xlu0 %722
        %v725 = vmul.f32 %v723, %v234
        %vm726 = vcmask 31744
        %v727 = vsel %vm726, %v233, 0
        %v730 = vsel %vm726, %v719, 0
        %732 = vmatpush.xpose.msra.mxu0 0.0
        %733 = vmatpush.xpose.msra.mxu0 0.0
        %734 = vmatpush.xpose.msra.mxu0 0.0
        %735 = vmatpush.xpose.msra.mxu0 0.0
        %736 = vmatpush.xpose.msra.mxu0 0.0
        %737 = vmatpush.xpose.msra.mxu0 0.0
        %738 = vmatpush.xpose.msra.mxu0 0.0
        %739 = vmatpush.xpose.msra.mxu0 0.0
        %740 = vmatpush.xpose.msra.mxu0 0.0
        %741 = vmatpush.xpose.msra.mxu0 0.0
        %742 = vmatpush.xpose.msra.mxu0 0.0
        %743 = vmatpush.xpose.msra.mxu0 0.0
        %744 = vmatpush.xpose.msra.mxu0 0.0
        %745 = vmatpush.xpose.msra.mxu0 0.0
        %746 = vmatpush.xpose.msra.mxu0 0.0
        %v747 = vand.u32 %v730, 4294901760
        %748 = vmatpush.xpose.msra.mxu0 %v747
        %v749 = vand.u32 %v727, 4294901760
        %v750 = vsub.f32 %v727, %v749
        %v751 = vand.u32 %v750, 4294901760
        %v752 = vsub.f32 %v750, %v751
        %v753 = vand.u32 %v752, 4294901760
        %754 = vmatmul.f32.gmra.mxu0 %v753
        %v755 = vpop.f32.mrf.mxu0
        %v756 = vadd.f32 %v725, %v755
        %757 = vdwg.mxu0
        %758 = vmatpush.xpose.msra.mxu0 0.0
        %759 = vmatpush.xpose.msra.mxu0 0.0
        %760 = vmatpush.xpose.msra.mxu0 0.0
        %761 = vmatpush.xpose.msra.mxu0 0.0
        %762 = vmatpush.xpose.msra.mxu0 0.0
        %763 = vmatpush.xpose.msra.mxu0 0.0
        %764 = vmatpush.xpose.msra.mxu0 0.0
        %765 = vmatpush.xpose.msra.mxu0 0.0
        %766 = vmatpush.xpose.msra.mxu0 0.0
        %767 = vmatpush.xpose.msra.mxu0 0.0
        %768 = vmatpush.xpose.msra.mxu0 0.0
        %769 = vmatpush.xpose.msra.mxu0 0.0
        %770 = vmatpush.xpose.msra.mxu0 0.0
        %771 = vmatpush.xpose.msra.mxu0 0.0
        %772 = vmatpush.xpose.msra.mxu0 0.0
        %v773 = vand.u32 %v730, 4294901760
        %v774 = vsub.f32 %v730, %v773
        %v775 = vand.u32 %v774, 4294901760
        %v776 = vsub.f32 %v774, %v775
        %v777 = vand.u32 %v776, 4294901760
        %778 = vmatpush.xpose.msra.mxu0 %v777
        %v779 = vand.u32 %v727, 4294901760
        %780 = vmatmul.f32.gmra.mxu0 %v779
        %v781 = vpop.f32.mrf.mxu0
        %v782 = vadd.f32 %v756, %v781
        %783 = vdwg.mxu0
        %784 = vmatpush.xpose.msra.mxu0 0.0
        %785 = vmatpush.xpose.msra.mxu0 0.0
        %786 = vmatpush.xpose.msra.mxu0 0.0
        %787 = vmatpush.xpose.msra.mxu0 0.0
        %788 = vmatpush.xpose.msra.mxu0 0.0
        %789 = vmatpush.xpose.msra.mxu0 0.0
        %790 = vmatpush.xpose.msra.mxu0 0.0
        %791 = vmatpush.xpose.msra.mxu0 0.0
        %792 = vmatpush.xpose.msra.mxu0 0.0
        %793 = vmatpush.xpose.msra.mxu0 0.0
        %794 = vmatpush.xpose.msra.mxu0 0.0
        %795 = vmatpush.xpose.msra.mxu0 0.0
        %796 = vmatpush.xpose.msra.mxu0 0.0
        %797 = vmatpush.xpose.msra.mxu0 0.0
        %798 = vmatpush.xpose.msra.mxu0 0.0
        %v799 = vand.u32 %v730, 4294901760
        %v800 = vsub.f32 %v730, %v799
        %801 = vmatpush.xpose.msra.mxu0 %v800
        %v802 = vand.u32 %v727, 4294901760
        %v803 = vsub.f32 %v727, %v802
        %804 = vmatmul.f32.gmra.mxu0 %v803
        %v805 = vpop.f32.mrf.mxu0
        %v806 = vadd.f32 %v782, %v805
        %807 = vdwg.mxu0
        %808 = vmatpush.xpose.msra.mxu0 0.0
        %809 = vmatpush.xpose.msra.mxu0 0.0
        %810 = vmatpush.xpose.msra.mxu0 0.0
        %811 = vmatpush.xpose.msra.mxu0 0.0
        %812 = vmatpush.xpose.msra.mxu0 0.0
        %813 = vmatpush.xpose.msra.mxu0 0.0
        %814 = vmatpush.xpose.msra.mxu0 0.0
        %815 = vmatpush.xpose.msra.mxu0 0.0
        %816 = vmatpush.xpose.msra.mxu0 0.0
        %817 = vmatpush.xpose.msra.mxu0 0.0
        %818 = vmatpush.xpose.msra.mxu0 0.0
        %819 = vmatpush.xpose.msra.mxu0 0.0
        %820 = vmatpush.xpose.msra.mxu0 0.0
        %821 = vmatpush.xpose.msra.mxu0 0.0
        %822 = vmatpush.xpose.msra.mxu0 0.0
        %v823 = vand.u32 %v730, 4294901760
        %824 = vmatpush.xpose.msra.mxu0 %v823
        %v825 = vand.u32 %v727, 4294901760
        %v826 = vsub.f32 %v727, %v825
        %v827 = vand.u32 %v826, 4294901760
        %828 = vmatmul.f32.gmra.mxu0 %v827
        %v829 = vpop.f32.mrf.mxu0
        %v830 = vadd.f32 %v806, %v829
        %831 = vdwg.mxu0
        %832 = vmatpush.xpose.msra.mxu0 0.0
        %833 = vmatpush.xpose.msra.mxu0 0.0
        %834 = vmatpush.xpose.msra.mxu0 0.0
        %835 = vmatpush.xpose.msra.mxu0 0.0
        %836 = vmatpush.xpose.msra.mxu0 0.0
        %837 = vmatpush.xpose.msra.mxu0 0.0
        %838 = vmatpush.xpose.msra.mxu0 0.0
        %839 = vmatpush.xpose.msra.mxu0 0.0
        %840 = vmatpush.xpose.msra.mxu0 0.0
        %841 = vmatpush.xpose.msra.mxu0 0.0
        %842 = vmatpush.xpose.msra.mxu0 0.0
        %843 = vmatpush.xpose.msra.mxu0 0.0
        %844 = vmatpush.xpose.msra.mxu0 0.0
        %845 = vmatpush.xpose.msra.mxu0 0.0
        %846 = vmatpush.xpose.msra.mxu0 0.0
        %v847 = vand.u32 %v730, 4294901760
        %v848 = vsub.f32 %v730, %v847
        %v849 = vand.u32 %v848, 4294901760
        %850 = vmatpush.xpose.msra.mxu0 %v849
        %v851 = vand.u32 %v727, 4294901760
        %852 = vmatmul.f32.gmra.mxu0 %v851
        %v853 = vpop.f32.mrf.mxu0
        %v854 = vadd.f32 %v830, %v853
        %855 = vdwg.mxu0
        %856 = vmatpush.xpose.msra.mxu0 0.0
        %857 = vmatpush.xpose.msra.mxu0 0.0
        %858 = vmatpush.xpose.msra.mxu0 0.0
        %859 = vmatpush.xpose.msra.mxu0 0.0
        %860 = vmatpush.xpose.msra.mxu0 0.0
        %861 = vmatpush.xpose.msra.mxu0 0.0
        %862 = vmatpush.xpose.msra.mxu0 0.0
        %863 = vmatpush.xpose.msra.mxu0 0.0
        %864 = vmatpush.xpose.msra.mxu0 0.0
        %865 = vmatpush.xpose.msra.mxu0 0.0
        %866 = vmatpush.xpose.msra.mxu0 0.0
        %867 = vmatpush.xpose.msra.mxu0 0.0
        %868 = vmatpush.xpose.msra.mxu0 0.0
        %869 = vmatpush.xpose.msra.mxu0 0.0
        %870 = vmatpush.xpose.msra.mxu0 0.0
        %v871 = vand.u32 %v730, 4294901760
        %872 = vmatpush.xpose.msra.mxu0 %v871
        %v873 = vand.u32 %v727, 4294901760
        %874 = vmatmul.f32.gmra.mxu0 %v873
        %v875 = vpop.f32.mrf.mxu0
        %v876 = vadd.f32 %v854, %v875
        %877 = vdwg.mxu0
        %878 = vset.pattern.permute.xlu0 5
        %879 = vperm.xlu0 %878, %v233
        %v880 = vpop.permute.xlu0 %879
        %v882 = vadd.f32 %v876, %v880
        %vm883 = vcmask 57344
        %v884 = vsel %vm883, %v882, -inf
        %885 = vmax.xlane.f32.xlu0 %v884
        %v886 = vpop.xlane.xlu0 %885
        %v887 = vmax.f32 %v886, 1.0
        %v888 = vsub.f32 %v882, %v887
        %v889 = vmul.f32 %v888, 1.442695
        %v890 = vpow.pop %v889
        %v891 = vsub.f32 1.0, %v887
        %v892 = vmul.f32 %v891, 1.442695
        %v893 = vpow.pop %v892
        %v894 = vsel %vm883, %v890, 0.0
        %895 = vadd.xlane.f32.xlu0 %v894
        %v896 = vpop.xlane.xlu0 %895
        %v897 = vadd.f32 %v893, %v896
        %899 = vrot.lane.b32.xlu0 %v890, 1
        %v900 = vpop.permute.xlu0 %899
        %vm902 = vcmask 7168
        %v903 = vsel %vm902, %v893, %v900
        %v904 = vrcp.pop %v897
        %v905 = vmul.f32 %v897, %v904
        %v906 = vsub.f32 1.0, %v905
        %v907 = vmul.f32 %v904, %v906
        %v908 = vadd.f32 %v904, %v907
        %vm909 = vweird.f32 %v897
        %vm910 = vweird.f32 %v904
        %vm911 = vmor %vm909, %vm910
        %v912 = vsel %vm911, %v904, %v908
        %v913 = vand.u32 2147483647, %v897
        %vm914 = vcmp.eq.f32.partialorder %v913, 8.507059e+37
        %v915 = vand.u32 %v897, 2147483648
        %v916 = vor.u32 1.1754944e-38, %v915
        %v917 = vsel %vm914, %v916, %v912
        %v918 = vmul.f32 %v903, %v917
        %vm919 = vcmask 65536
        %920 = vst.msk [vmem:[%s213] sm:$0x1] %vm919, %v918
        %s921 = sand.u32 %s118, 1
        %s922 = scalar_lea.sflag [#allocation4], %s921
        %s923 = sand.u32 %s118, 1
        %s924 = scalar_lea.vmem [#allocation5], %s923
        // Predicated region
        $region41: #{tpu_custom_call.1} parent=35 // pred_check
          %p925 = pneg %p128
        $region42: #{tpu_custom_call.1} parent=35 // pred_check_branch
          %927 = sbr.rel (%p925) target = $region44
        $region43: #{tpu_custom_call.1} parent=35 // pred_region
          %929 = vsyncadd %s922, 0
          %s930 = scalar_lea.hbm %s4, %s21
          %s932 = sshll.u32 %s924, 4
          %s933 = int_to_ptr.vmem [resolvable:$true] %s932
          %s934 = sshll.u32 %s930, 4
          %s935 = int_to_ptr.hbm [resolvable:$true] %s934
          %937 = dma.vmem_to_hbm [thread:$0]  %s933, 16, %s935, %s922
        $region44: #{tpu_custom_call.1} parent=35 // pred_fallthru
          _
      $region36: #{tpu_custom_call.1} parent=5 // pred_fallthru
        _
      %p938 = scmp.le.s32.totalorder 2, %s16
      // Predicated region
      $region45: #{tpu_custom_call.1} parent=5 // pred_check
        %p939 = pneg %p938
      $region46: #{tpu_custom_call.1} parent=5 // pred_check_branch
        %941 = sbr.rel (%p939) target = $region48
      $region47: #{tpu_custom_call.1} parent=5 // pred_region
        %s942 = ssub.s32 %s16, 2
        // Predicated region
        $region49: #{tpu_custom_call.1} parent=47 // pred_check
          %p943 = pneg %p134
        $region50: #{tpu_custom_call.1} parent=47 // pred_check_branch
          %945 = sbr.rel (%p943) target = $region52
        $region51: #{tpu_custom_call.1} parent=47 // pred_region
          %s946 = sand.u32 %s119, 1
          %s947 = scalar_lea.sflag [#allocation4], %s946
          %s948 = sand.u32 %s119, 1
          %s949 = scalar_lea.vmem [#allocation5], %s948
          %951 = dma.done %s947, 16
        $region52: #{tpu_custom_call.1} parent=47 // pred_fallthru
          _
      $region48: #{tpu_custom_call.1} parent=5 // pred_fallthru
        _
    $region6: #{tpu_custom_call.1} parent=1 // loop_footer
      %s20 = sadd.s32 1, %s16
    $region7: #{tpu_custom_call.1} parent=1 // loop_footer_branch
      %15 = sbr.rel target = $region3
    $region8: #{tpu_custom_call.1} parent=1 // loop_exit
      _
    %952 = vsyncpa [#allocation3], 1
    %s953 = scalar_lea.sflag [#allocation3], 1
    %954 = vsyncpa %s953, 1
    %955 = vsyncpa [#allocation4], 1
    %s956 = scalar_lea.sflag [#allocation4], 1
    %957 = vsyncpa %s956, 1

</llo_original>
